<compile_context>
chip_gen: v7x
topology: tpu7x:2x2x1
jax: 0.10.0
libtpu: 0.0.40
codegen_flags: <defaults>
</compile_context>

<pallas_src>
import jax
import jax.numpy as jnp
from jax.experimental import pallas as pl
from jax.experimental.pallas import tpu as pltpu


def _fuzzy_kernel(x_ref, mu_ref, nis_ref, o_ref):
    # x_ref:   (TB, n)     batch tile of crisp inputs
    # mu_ref:  (n, r)      membership centers (resident across grid steps)
    # nis_ref: (n, r)      precomputed -1 / sigma**2 (resident across grid steps)
    # o_ref:   (TB, n, r)  output tile, lane-dense along r
    x = x_ref[...][:, :, None]                       # lane broadcast -> (TB, n, 1)
    diff = x - mu_ref[...]                           # (TB, n, r), VPU
    o_ref[...] = jnp.exp((diff * diff) * nis_ref[...])   # mul/mul VPU, exp EUP


def fuzzy_layer(x, mu, sigma):
    """Pallas implementation of _FuzzyLayer.forward.

    Args:
      x:     (batch, n) float32 crisp inputs
      mu:    (n, r) float32 membership-function centers
      sigma: (n, r) float32 membership-function widths
    Returns:
      (batch, n, r) float32 fuzzified output (Gaussian membership values).
    """
    B, n = x.shape
    n_mu, r = mu.shape
    assert n_mu == n and sigma.shape == (n, r)
    itemsize = jnp.dtype(x.dtype).itemsize

    # --- Lane-density guard: pad r up to a multiple of 128 so output stores are
    # unmasked; padded columns use sigma=1 (finite values) and are sliced off.
    pad = (-r) % 128
    if pad:
        mu_p = jnp.pad(mu, ((0, 0), (0, pad)))
        sigma_p = jnp.pad(sigma, ((0, 0), (0, pad)), constant_values=1.0)
    else:
        mu_p, sigma_p = mu, sigma
    r_pad = r + pad

    # --- Hoisted once in the wrapper: removes the per-element divide + negate.
    neg_inv_sig2 = -1.0 / (sigma_p * sigma_p)

    # --- Generation-aware VMEM budget (v5e/v6e: 128 MiB physical, v7x: 64 MiB).
    try:
        vmem_cap = int(pltpu.get_tpu_info().vmem_capacity_bytes)
    except Exception:
        vmem_cap = 64 * 1024 * 1024
    vmem_limit = int(min(vmem_cap * 3 // 4, 96 * 1024 * 1024))
    budget = vmem_limit * 2 // 3          # headroom for pipeline bookkeeping

    # --- Batch tile sized against the true double-buffered footprint:
    # 2x output tile + 2x x tile + 2x (mu + neg_inv_sig2).
    out_row_bytes = n * r_pad * itemsize
    x_row_bytes = max(pl.cdiv(n, 128) * 128, 128) * itemsize   # lane-padded row
    const_bytes = 2 * 2 * n * r_pad * itemsize
    per_row_bytes = 2 * (out_row_bytes + x_row_bytes)
    tb = max(1, (budget - const_bytes) // per_row_bytes)
    tb = min(tb, B)
    # Keep >= 2 grid steps at large B so both v7x TensorCores get work.
    half_rounded = ((pl.cdiv(B, 2) + 7) // 8) * 8
    tb = min(tb, max(half_rounded, 8))
    if tb >= 8:
        tb = (tb // 8) * 8                 # sublane-aligned batch tiles
    tb = int(max(1, min(tb, B)))
    grid = (pl.cdiv(B, tb),)

    cost = pl.CostEstimate(
        flops=3 * B * n * r,               # sub, mul, mul per element
        transcendentals=B * n * r,         # one exp per element
        bytes_accessed=(B * n + 2 * n * r + B * n * r) * itemsize,
    )

    out = pl.pallas_call(
        _fuzzy_kernel,
        out_shape=jax.ShapeDtypeStruct((B, n, r_pad), x.dtype),
        grid_spec=pltpu.PrefetchScalarGridSpec(
            num_scalar_prefetch=0,
            grid=grid,
            in_specs=[
                pl.BlockSpec((tb, n), lambda b: (b, 0)),          # x slab (2-D)
                pl.BlockSpec((n, r_pad), lambda b: (0, 0)),       # mu (resident)
                pl.BlockSpec((n, r_pad), lambda b: (0, 0)),       # -1/sigma^2
            ],
            out_specs=pl.BlockSpec((tb, n, r_pad), lambda b: (b, 0, 0)),
        ),
        compiler_params=pltpu.CompilerParams(
            dimension_semantics=("parallel",),   # megacore-shardable batch axis
            vmem_limit_bytes=vmem_limit,
        ),
        cost_estimate=cost,
    )(x, mu_p, neg_inv_sig2)

    if pad:
        out = out[:, :, :r]
    return out


def fuzzy_layer_ref(x, mu, sigma):
    # Pure-JAX reference matching the PyTorch forward exactly.
    return jnp.exp(-jnp.square(x[:, :, None] - mu) / jnp.square(sigma))


if __name__ == "__main__":
    # Small shapes consistent with the module: batch=2, n_input=8, n_rules=128.
    B, N, R = 2, 8, 128

    key = jax.random.PRNGKey(0)
    kx, km, ks = jax.random.split(key, 3)
    x = jax.random.normal(kx, (B, N), dtype=jnp.float32)
    mu = jax.random.normal(km, (N, R), dtype=jnp.float32)
    sigma = jax.random.uniform(ks, (N, R), dtype=jnp.float32, minval=0.5, maxval=2.0)

    out = fuzzy_layer(x, mu, sigma)
    out = jax.block_until_ready(out)

    ref = fuzzy_layer_ref(x, mu, sigma)
    assert out.shape == (B, N, R)
    # Note: -1/sigma^2 rewrite (vs torch's explicit divide) can differ by ~1 ulp.
    assert jnp.allclose(out, ref, rtol=1e-5, atol=1e-5), "mismatch vs reference"

    print("KERNEL_OK")
</pallas_src>

<mosaic_0001>
module attributes {stable_mosaic.version = 11 : i64} {
  func.func @_fuzzy_kernel(%arg0: i32, %arg1: memref<2x8xf32, #tpu.memory_space<vmem>>, %arg2: memref<8x128xf32, #tpu.memory_space<vmem>>, %arg3: memref<8x128xf32, #tpu.memory_space<vmem>>, %arg4: memref<2x8x128xf32, #tpu.memory_space<vmem>>) attributes {dimension_semantics = [#tpu.dimension_semantics<parallel>], iteration_bounds = array<i64: 1>, scalar_prefetch = 0 : i64, scratch_operands = 0 : i64, tpu.core_type = #tpu.core_type<tc>, window_params = [{transform_indices = @transform_0, window_bounds = array<i64: 2, 8>}, {pipeline_mode = #tpu.pipeline_mode<synchronous>, transform_indices = @transform_1, window_bounds = array<i64: 8, 128>}, {pipeline_mode = #tpu.pipeline_mode<synchronous>, transform_indices = @transform_2, window_bounds = array<i64: 8, 128>}, {transform_indices = @transform_3, window_bounds = array<i64: 2, 8, 128>}]} {
    %c0 = arith.constant 0 : index
    %c0_0 = arith.constant 0 : index
    %0 = vector.load %arg1[%c0, %c0_0] : memref<2x8xf32, #tpu.memory_space<vmem>>, vector<2x8xf32>
    %1 = vector.shape_cast %0 : vector<2x8xf32> to vector<2x8x1xf32>
    %c0_1 = arith.constant 0 : index
    %c0_2 = arith.constant 0 : index
    %2 = vector.load %arg2[%c0_1, %c0_2] : memref<8x128xf32, #tpu.memory_space<vmem>>, vector<8x128xf32>
    %3 = vector.shape_cast %2 : vector<8x128xf32> to vector<1x8x128xf32>
    %4 = vector.broadcast %1 : vector<2x8x1xf32> to vector<2x8x128xf32>
    %5 = vector.broadcast %3 : vector<1x8x128xf32> to vector<2x8x128xf32>
    %6 = arith.subf %4, %5 : vector<2x8x128xf32>
    %7 = arith.mulf %6, %6 : vector<2x8x128xf32>
    %c0_3 = arith.constant 0 : index
    %c0_4 = arith.constant 0 : index
    %8 = vector.load %arg3[%c0_3, %c0_4] : memref<8x128xf32, #tpu.memory_space<vmem>>, vector<8x128xf32>
    %9 = vector.shape_cast %8 : vector<8x128xf32> to vector<1x8x128xf32>
    %10 = vector.broadcast %9 : vector<1x8x128xf32> to vector<2x8x128xf32>
    %11 = arith.mulf %7, %10 : vector<2x8x128xf32>
    %12 = math.exp %11 : vector<2x8x128xf32>
    %c0_5 = arith.constant 0 : index
    %c0_6 = arith.constant 0 : index
    %c0_7 = arith.constant 0 : index
    %13 = vector.load %arg4[%c0_5, %c0_6, %c0_7] : memref<2x8x128xf32, #tpu.memory_space<vmem>>, vector<2x8x128xf32>
    tpu.vector_store %arg4[%c0_5, %c0_6, %c0_7], %12 {strides = array<i32>} : memref<2x8x128xf32, #tpu.memory_space<vmem>>, vector<2x8x128xf32>,
    return
  }
  func.func @transform_0(%arg0: i32) -> (i32, i32) {
    %c0_i32 = arith.constant 0 : i32
    %c0_i32_0 = arith.constant 0 : i32
    return %arg0, %c0_i32 : i32, i32
  }
  func.func @transform_1(%arg0: i32) -> (i32, i32) {
    %c0_i32 = arith.constant 0 : i32
    %c0_i32_0 = arith.constant 0 : i32
    %c0_i32_1 = arith.constant 0 : i32
    return %c0_i32, %c0_i32_0 : i32, i32
  }
  func.func @transform_2(%arg0: i32) -> (i32, i32) {
    %c0_i32 = arith.constant 0 : i32
    %c0_i32_0 = arith.constant 0 : i32
    %c0_i32_1 = arith.constant 0 : i32
    return %c0_i32, %c0_i32_0 : i32, i32
  }
  func.func @transform_3(%arg0: i32) -> (i32, i32, i32) {
    %c0_i32 = arith.constant 0 : i32
    %c0_i32_0 = arith.constant 0 : i32
    %c0_i32_1 = arith.constant 0 : i32
    return %arg0, %c0_i32, %c0_i32_0 : i32, i32, i32
  }
}

</mosaic_0001>

<llo_original>
// kernel: tpu_custom_call.1
$region0: #{tpu_custom_call.1}
  #allocation0 [shape = 'u32[]', space=smem, size = 0x4, offset = 0x4, fixed_abs, tag = 'smem constant byte address 0x4 - core index']
  #allocation1 [shape = 'u32[144,128]{1,0:T(1,128)}', space=vmem, size = 0x12000, scoped, tag = 'internal scratch']
  %s0 = inlined_call_operand.hbm [shape: f32[2,8], index: 0, kind: input, shape index: {}]
  %s1 = inlined_call_operand.hbm [shape: f32[8,128], index: 1, kind: input, shape index: {}]
  %s2 = inlined_call_operand.hbm [shape: f32[8,128], index: 2, kind: input, shape index: {}]
  %s3 = inlined_call_operand.hbm [shape: f32[2,8,128], index: 3, kind: output, shape index: {}]
  %s4 = sld [smem:[#allocation0]]
  $region34: #{tpu_custom_call.1} parent=0
    _
  %s6 = ssub.s32 1, %s4
  %s7 = scalar_select 0, %s6, %s4
  $region1: #{tpu_custom_call.1} parent=0
    #allocation2 [shape = 'u8[1024]{0}', space=vmem, size = 0x400, scoped, tag = 'input window, operand 0, single buffered']
    #allocation3 [shape = 's32[1]{0}', space=sflag, size = 0x4, scoped, tag = 'scoped memory for tpu_custom_call.1']
    #allocation4 [shape = 's32[1]{0}', space=sflag, size = 0x4, scoped, tag = 'scoped memory for tpu_custom_call.1']
    #allocation5 [shape = 'u8[4096]{0}', space=vmem, size = 0x1000, scoped, tag = 'input window, operand 1, single buffered']
    #allocation6 [shape = 's32[1]{0}', space=sflag, size = 0x4, scoped, tag = 'scoped memory for tpu_custom_call.1']
    #allocation7 [shape = 'u8[4096]{0}', space=vmem, size = 0x1000, scoped, tag = 'input window, operand 2, single buffered']
    #allocation8 [shape = 'u8[8192]{0}', space=vmem, size = 0x2000, scoped, tag = 'output window, operand 0, single buffered']
    %8 = vsyncpa [#allocation3], 0
    %9 = vsyncpa [#allocation6], 0
    %10 = vsyncpa [#allocation4], 0
    // Predicated region
    $region2: #{tpu_custom_call.1} parent=1 // pred_check
      _
    $region3: #{tpu_custom_call.1} parent=1 // pred_check_branch
      %12 = sbr.rel (0) target = $region5
    $region4: #{tpu_custom_call.1} parent=1 // pred_region
      %s14 = ssub.s32 32, 32
      %15 = vsyncadd [#allocation3], %s14
      %s17 = sshll.u32 [#allocation2], 4
      %s18 = int_to_ptr.vmem [resolvable:$true] %s17
      %20 = dma.hbm_to_vmem [thread:$0]  %s0, 32, %s18, [#allocation3]
    $region5: #{tpu_custom_call.1} parent=1 // pred_fallthru
      _
    // Predicated region
    $region6: #{tpu_custom_call.1} parent=1 // pred_check
      _
    $region7: #{tpu_custom_call.1} parent=1 // pred_check_branch
      %22 = sbr.rel (0) target = $region9
    $region8: #{tpu_custom_call.1} parent=1 // pred_region
      %s24 = ssub.s32 128, 128
      %25 = vsyncadd [#allocation6], %s24
      %s27 = sshll.u32 [#allocation5], 4
      %s28 = int_to_ptr.vmem [resolvable:$true] %s27
      %30 = dma.hbm_to_vmem [thread:$0]  %s1, 128, %s28, [#allocation6]
    $region9: #{tpu_custom_call.1} parent=1 // pred_fallthru
      _
    // Predicated region
    $region10: #{tpu_custom_call.1} parent=1 // pred_check
      _
    $region11: #{tpu_custom_call.1} parent=1 // pred_check_branch
      %32 = sbr.rel (0) target = $region13
    $region12: #{tpu_custom_call.1} parent=1 // pred_region
      %s34 = ssub.s32 128, 128
      %35 = vsyncadd [#allocation6], %s34
      %s37 = sshll.u32 [#allocation7], 4
      %s38 = int_to_ptr.vmem [resolvable:$true] %s37
      %40 = dma.hbm_to_vmem [thread:$0]  %s2, 128, %s38, [#allocation6]
    $region13: #{tpu_custom_call.1} parent=1 // pred_fallthru
      _
    // Predicated region
    $region14: #{tpu_custom_call.1} parent=1 // pred_check
      _
    $region15: #{tpu_custom_call.1} parent=1 // pred_check_branch
      %42 = sbr.rel (0) target = $region17
    $region16: #{tpu_custom_call.1} parent=1 // pred_region
      %43 = dma.done [#allocation3], 32
    $region17: #{tpu_custom_call.1} parent=1 // pred_fallthru
      _
    // Predicated region
    $region18: #{tpu_custom_call.1} parent=1 // pred_check
      _
    $region19: #{tpu_custom_call.1} parent=1 // pred_check_branch
      %45 = sbr.rel (0) target = $region21
    $region20: #{tpu_custom_call.1} parent=1 // pred_region
      %46 = dma.done [#allocation6], 128
    $region21: #{tpu_custom_call.1} parent=1 // pred_fallthru
      _
    // Predicated region
    $region22: #{tpu_custom_call.1} parent=1 // pred_check
      _
    $region23: #{tpu_custom_call.1} parent=1 // pred_check_branch
      %48 = sbr.rel (0) target = $region25
    $region24: #{tpu_custom_call.1} parent=1 // pred_region
      %49 = dma.done [#allocation6], 128
    $region25: #{tpu_custom_call.1} parent=1 // pred_fallthru
      _
    %v50 = vld [vmem:[#allocation2] sm:$0x3]
    %v51 = vlaneseq
    %v52 = vshrl.u32 %v51, 7
    %v53 = vsub.s32 0, %v52
    %v54 = vrot.slane %v50, %v53
    %56 = vbcast.lane.b32.xlu0 %v54, 256
    %v57 = vpop.permute.xlu0 %56
    %v58 = vlaneseq
    %v59 = vshrl.u32 %v58, 7
    %v60 = vsub.s32 1, %v59
    %v61 = vrot.slane %v50, %v60
    %63 = vbcast.lane.b32.xlu0 %v61, 256
    %v64 = vpop.permute.xlu0 %63
    %v65 = vld [vmem:[#allocation5] sm:$0xff]
    %v66 = vsub.f32 %v57, %v65
    %v67 = vsub.f32 %v64, %v65
    %v68 = vmul.f32 %v66, %v66
    %v69 = vmul.f32 %v67, %v67
    %v70 = vld [vmem:[#allocation7] sm:$0xff]
    %v71 = vmul.f32 %v68, %v70
    %v72 = vmul.f32 %v69, %v70
    %v73 = vmul.f32 %v71, 1.442695
    %v74 = vpow.pop %v73
    %v75 = vmul.f32 %v72, 1.442695
    %v76 = vpow.pop %v75
    %77 = vst [vmem:[#allocation8] sm:$0xff] %v74
    %78 = vst [vmem:[#allocation8 + $0x8] sm:$0xff] %v76
    // Predicated region
    $region26: #{tpu_custom_call.1} parent=1 // pred_check
      _
    $region27: #{tpu_custom_call.1} parent=1 // pred_check_branch
      %80 = sbr.rel (0) target = $region29
    $region28: #{tpu_custom_call.1} parent=1 // pred_region
      %s82 = ssub.s32 256, 256
      %83 = vsyncadd [#allocation4], %s82
      %s84 = sshll.u32 [#allocation8], 4
      %s85 = int_to_ptr.vmem [resolvable:$true] %s84
      %90 = dma.vmem_to_hbm [thread:$0]  %s85, 256, %s3, [#allocation4], 128, 128, 8
    $region29: #{tpu_custom_call.1} parent=1 // pred_fallthru
      _
    // Predicated region
    $region30: #{tpu_custom_call.1} parent=1 // pred_check
      _
    $region31: #{tpu_custom_call.1} parent=1 // pred_check_branch
      %92 = sbr.rel (0) target = $region33
    $region32: #{tpu_custom_call.1} parent=1 // pred_region
      %93 = dma.done [#allocation4], 256
    $region33: #{tpu_custom_call.1} parent=1 // pred_fallthru
      _
    %94 = vsyncpa [#allocation3], 1
    %95 = vsyncpa [#allocation6], 1
    %96 = vsyncpa [#allocation4], 1

</llo_original>
